<compile_context>
chip_gen: v7x
topology: tpu7x:2x2x1
jax: 0.10.0
libtpu: 0.0.40
codegen_flags: <defaults>
</compile_context>

<pallas_src>
import functools

import jax
import jax.numpy as jnp
from jax.experimental import pallas as pl
from jax.experimental.pallas import tpu as pltpu


def _fctree_kernel(
    img_ref,      # (TM, D)       image features, compute dtype
    aux_ref,      # (TB, 8, D)    f32: rows 0..5 node biases, row 6 indicator
    leaf_w_ref,   # (D, D)        image half of leaf weight
    mid_w_ref,    # (D, D)        image half of middle weight
    mer_w_ref,    # (D, D)        image half of merge weight
    root_w_ref,   # (D, D)        image half of root weight
    out_ref,      # (TM, D)
    *,
    panels,       # static: P panels per batch element (TM = TB * panels)
):
    f32 = jnp.float32
    img = img_ref[...]
    cdt = img.dtype
    tm, d = img.shape
    tb = tm // panels

    aux = aux_ref[...]                                    # (tb, 8, d) f32

    def row(i):
        # Per-batch (tb, 1, d) row broadcast across the P panels -> (tm, d).
        v = aux[:, i:i + 1, :]
        return jnp.broadcast_to(v, (tb, panels, d)).reshape(tm, d)

    # Leaf layer: image half identical for both leaves -> one matmul.
    leaf_img = jnp.dot(img, leaf_w_ref[...], preferred_element_type=f32)
    out_ll = jnp.maximum(leaf_img + row(3), 0.0)
    out_lr = jnp.maximum(leaf_img + row(5), 0.0)

    # Middle layer: two dots against the resident RHS (no concat/copy).
    mid_l = jnp.dot(out_ll.astype(cdt), mid_w_ref[...], preferred_element_type=f32)
    mid_r = jnp.dot(out_lr.astype(cdt), mid_w_ref[...], preferred_element_type=f32)
    out_l = jnp.maximum(mid_l + row(2), 0.0)
    out_r = jnp.maximum(mid_r + row(4), 0.0) * row(6)     # row 6 = indicator

    # Merge layer.
    out_m = jnp.maximum(
        jnp.dot((out_l + out_r).astype(cdt), mer_w_ref[...],
                preferred_element_type=f32) + row(1),
        0.0,
    )

    # Root layer.
    out_root = jnp.maximum(
        jnp.dot(out_m.astype(cdt), root_w_ref[...],
                preferred_element_type=f32) + row(0),
        0.0,
    )

    out_ref[...] = out_root.astype(out_ref.dtype)


@functools.partial(jax.jit,
                   static_argnames=("max_tile_m", "compute_dtype", "out_dtype"))
def fctree_forward(image_feature, word_input, indicator, params, *,
                   max_tile_m=512, compute_dtype=jnp.bfloat16, out_dtype=None):
    """Pallas implementation of FCTreeNet.forward.

    image_feature: (B, P, img_dim) f32
    word_input:    (B, 6, in_dim)  f32
    indicator:     (B, 1)          f32
    returns:       (B * P, img_dim) in `out_dtype` (default: input dtype)
    """
    B, P, D = image_feature.shape
    _, six, in_dim = word_input.shape
    assert six == 6
    M = B * P
    out_dtype = image_feature.dtype if out_dtype is None else out_dtype

    (fc_w, fc_b,
     leaf_ww, leaf_wi, leaf_b,
     mid_ww, mid_wi, mid_b,
     mer_ww, mer_wi, mer_b,
     root_ww, root_wi, root_b) = params

    # ---- Word-path pre-pass (tiny: 6 rows per batch element, plain JAX). ----
    e = word_input.reshape(B * 6, in_dim).astype(jnp.float32) @ fc_w + fc_b
    e = e.reshape(B, 6, in_dim)

    def node_bias(node, ww, b):                      # -> (B, D) f32
        return e[:, node, :] @ ww + b

    # Pack per-batch data into one small f32 tensor (B, 8, D):
    #   index i in 0..5 -> bias for tree node i (its layer's word half + bias)
    #   index 6         -> branch indicator broadcast across D
    #   index 7         -> zero padding (sublane dim multiple of 8)
    aux = jnp.stack(
        [
            node_bias(0, root_ww, root_b),
            node_bias(1, mer_ww, mer_b),
            node_bias(2, mid_ww, mid_b),
            node_bias(3, leaf_ww, leaf_b),
            node_bias(4, mid_ww, mid_b),
            node_bias(5, leaf_ww, leaf_b),
            jnp.broadcast_to(indicator.astype(jnp.float32), (B, D)),
            jnp.zeros((B, D), jnp.float32),
        ],
        axis=1,
    )                                                # (B, 8, D) f32

    # Batch-aligned row tiling: tile_b batch elements = tile_b * P rows per
    # grid step; tile_b = 1 always divides B (no whole-problem fallback).
    tile_b = 1
    for cand in range(min(B, max(1, max_tile_m // P)), 0, -1):
        if B % cand == 0:
            tile_b = cand
            break
    tile_m = tile_b * P

    img_rows = image_feature.reshape(M, D).astype(compute_dtype)
    w_leaf = leaf_wi.astype(compute_dtype)
    w_mid = mid_wi.astype(compute_dtype)
    w_mer = mer_wi.astype(compute_dtype)
    w_root = root_wi.astype(compute_dtype)

    row_spec = pl.BlockSpec((tile_m, D), lambda b: (b, 0))
    aux_spec = pl.BlockSpec((tile_b, 8, D), lambda b: (b, 0, 0))
    w_spec = pl.BlockSpec((D, D), lambda b: (0, 0))   # constant index: 1 DMA

    # Explicit VMEM budget (double-buffered streams + weights + f32 headroom).
    csz = jnp.dtype(compute_dtype).itemsize
    osz = jnp.dtype(out_dtype).itemsize
    budget = (2 * 4 * D * D * csz              # weights (double-buffered)
              + 2 * tile_m * D * csz           # image stream
              + 2 * tile_b * 8 * D * 4         # aux stream (f32)
              + 2 * tile_m * D * osz           # output stream
              + 8 * tile_m * D * 4)            # f32 activations / headroom
    vmem_limit = int(max(2 * budget, 32 * 2**20))

    out = pl.pallas_call(
        functools.partial(_fctree_kernel, panels=P),
        out_shape=jax.ShapeDtypeStruct((M, D), out_dtype),
        grid_spec=pltpu.PrefetchScalarGridSpec(
            num_scalar_prefetch=0,
            grid=(B // tile_b,),
            in_specs=[row_spec, aux_spec] + [w_spec] * 4,
            out_specs=row_spec,
        ),
        compiler_params=pltpu.CompilerParams(
            dimension_semantics=("parallel",),
            vmem_limit_bytes=vmem_limit,
        ),
    )(img_rows, aux, w_leaf, w_mid, w_mer, w_root)
    return out


def init_params(key, in_dim, img_dim):
    """Deterministic synthetic parameters matching the nn.Linear shapes.

    Each Linear(in, out) gets weight (out, in) and bias (out,) like PyTorch;
    the (in_dim+img_dim)->img_dim weights are pre-transposed and split into a
    word half and an image half (cat order in the module is (word, image)).
    """
    def linear(k, fan_in, fan_out):
        kw, kb = jax.random.split(k)
        bound = 1.0 / jnp.sqrt(fan_in)
        w = jax.random.uniform(kw, (fan_out, fan_in), jnp.float32, -bound, bound)
        b = jax.random.uniform(kb, (fan_out,), jnp.float32, -bound, bound)
        return w, b

    k_fc, k_leaf, k_mid, k_mer, k_root = jax.random.split(key, 5)
    fc_w, fc_b = linear(k_fc, in_dim, in_dim)
    leaf_w, leaf_b = linear(k_leaf, in_dim + img_dim, img_dim)
    mid_w, mid_b = linear(k_mid, in_dim + img_dim, img_dim)
    mer_w, mer_b = linear(k_mer, in_dim + img_dim, img_dim)
    root_w, root_b = linear(k_root, in_dim + img_dim, img_dim)

    def split_t(w):
        wt = w.T                       # (in_dim + img_dim, img_dim)
        return wt[:in_dim, :], wt[in_dim:, :]

    leaf_ww, leaf_wi = split_t(leaf_w)
    mid_ww, mid_wi = split_t(mid_w)
    mer_ww, mer_wi = split_t(mer_w)
    root_ww, root_wi = split_t(root_w)

    kernel_params = (
        fc_w.T, fc_b.reshape(1, -1),
        leaf_ww, leaf_wi, leaf_b.reshape(1, -1),
        mid_ww, mid_wi, mid_b.reshape(1, -1),
        mer_ww, mer_wi, mer_b.reshape(1, -1),
        root_ww, root_wi, root_b.reshape(1, -1),
    )
    torch_style = dict(
        fc=(fc_w, fc_b), leaf=(leaf_w, leaf_b), middle=(mid_w, mid_b),
        merge=(mer_w, mer_b), root=(root_w, root_b),
    )
    return kernel_params, torch_style


def reference_forward(image_feature, inp, indicator, tp):
    """Pure-JAX transcription of the PyTorch forward (uses concatenation)."""
    B, P, img_dim = image_feature.shape
    in_dim = inp.shape[-1]

    def lin(x, wb):
        w, b = wb
        return x @ w.T + b

    relu = lambda x: jnp.maximum(x, 0.0)

    x = lin(inp.reshape(-1, in_dim), tp["fc"]).reshape(B, 6, in_dim)
    x = jnp.repeat(x[:, None, :, :], P, axis=1)                 # (B, P, 6, in)
    ind = jnp.repeat(indicator[:, None, :], P, axis=1).reshape(-1, 1)
    img = image_feature.reshape(-1, img_dim)

    node = lambda i: x[:, :, i, :].reshape(-1, in_dim)
    out_ll = relu(lin(jnp.concatenate([node(3), img], -1), tp["leaf"]))
    out_lr = relu(lin(jnp.concatenate([node(5), img], -1), tp["leaf"]))
    out_l = relu(lin(jnp.concatenate([node(2), out_ll], -1), tp["middle"]))
    out_r = relu(lin(jnp.concatenate([node(4), out_lr], -1), tp["middle"]))
    out_r = out_r * ind
    out_m = relu(lin(jnp.concatenate([node(1), out_l + out_r], -1), tp["merge"]))
    out_root = relu(lin(jnp.concatenate([node(0), out_m], -1), tp["root"]))
    return out_root


if __name__ == "__main__":
    B, P = 4, 16                # batch, panel-pair count
    in_dim, img_dim = 64, 128   # img_dim multiple of 128 -> lane-dense output

    key = jax.random.PRNGKey(0)
    k_img, k_inp, k_ind, k_par = jax.random.split(key, 4)

    image_feature = jax.random.normal(k_img, (B, P, img_dim), jnp.float32)
    word_input = jax.random.normal(k_inp, (B, 6, in_dim), jnp.float32)
    indicator = jax.random.bernoulli(k_ind, 0.5, (B, 1)).astype(jnp.float32)

    kernel_params, torch_style = init_params(k_par, in_dim, img_dim)
    ref = reference_forward(image_feature, word_input, indicator, torch_style)

    # f32 compute / f32 output: whole (B*P, D) problem in one batch-aligned tile.
    out_f32 = fctree_forward(image_feature, word_input, indicator, kernel_params,
                             compute_dtype=jnp.float32)
    out_f32 = jax.block_until_ready(out_f32)
    assert out_f32.shape == (B * P, img_dim)
    assert jnp.allclose(out_f32, ref, rtol=1e-4, atol=1e-4), (
        float(jnp.max(jnp.abs(out_f32 - ref))))

    # Default bf16 operands / f32 accumulation, forced multi-step grid
    # (tile_b = 1 -> 4 grid steps) to exercise tiling and the constant-index
    # weight reuse.
    out_bf16 = fctree_forward(image_feature, word_input, indicator, kernel_params,
                              max_tile_m=16)
    out_bf16 = jax.block_until_ready(out_bf16)
    assert out_bf16.dtype == jnp.float32
    assert float(jnp.max(jnp.abs(out_bf16 - ref))) < 5e-2

    # bf16 output writeback (halves the only output stream).
    out_bf16o = fctree_forward(image_feature, word_input, indicator, kernel_params,
                               out_dtype=jnp.bfloat16)
    out_bf16o = jax.block_until_ready(out_bf16o)
    assert float(jnp.max(jnp.abs(out_bf16o.astype(jnp.float32) - ref))) < 1e-1

    print("KERNEL_OK")
</pallas_src>

<mosaic_0001>
module attributes {stable_mosaic.version = 11 : i64} {
  func.func @_fctree_kernel(%arg0: i32, %arg1: memref<64x128xf32, #tpu.memory_space<vmem>>, %arg2: memref<4x8x128xf32, #tpu.memory_space<vmem>>, %arg3: memref<128x128xf32, #tpu.memory_space<vmem>>, %arg4: memref<128x128xf32, #tpu.memory_space<vmem>>, %arg5: memref<128x128xf32, #tpu.memory_space<vmem>>, %arg6: memref<128x128xf32, #tpu.memory_space<vmem>>, %arg7: memref<64x128xf32, #tpu.memory_space<vmem>>) attributes {dimension_semantics = [#tpu.dimension_semantics<parallel>], iteration_bounds = array<i64: 1>, scalar_prefetch = 0 : i64, scratch_operands = 0 : i64, tpu.core_type = #tpu.core_type<tc>, window_params = [{transform_indices = @transform_0, window_bounds = array<i64: 64, 128>}, {transform_indices = @transform_1, window_bounds = array<i64: 4, 8, 128>}, {pipeline_mode = #tpu.pipeline_mode<synchronous>, transform_indices = @transform_2, window_bounds = array<i64: 128, 128>}, {pipeline_mode = #tpu.pipeline_mode<synchronous>, transform_indices = @transform_3, window_bounds = array<i64: 128, 128>}, {pipeline_mode = #tpu.pipeline_mode<synchronous>, transform_indices = @transform_4, window_bounds = array<i64: 128, 128>}, {pipeline_mode = #tpu.pipeline_mode<synchronous>, transform_indices = @transform_5, window_bounds = array<i64: 128, 128>}, {transform_indices = @transform_6, window_bounds = array<i64: 64, 128>}]} {
    %c0 = arith.constant 0 : index
    %c0_0 = arith.constant 0 : index
    %0 = vector.load %arg1[%c0, %c0_0] : memref<64x128xf32, #tpu.memory_space<vmem>>, vector<64x128xf32>
    %c0_1 = arith.constant 0 : index
    %c0_2 = arith.constant 0 : index
    %c0_3 = arith.constant 0 : index
    %1 = vector.load %arg2[%c0_1, %c0_2, %c0_3] : memref<4x8x128xf32, #tpu.memory_space<vmem>>, vector<4x8x128xf32>
    %c0_4 = arith.constant 0 : index
    %c0_5 = arith.constant 0 : index
    %2 = vector.load %arg3[%c0_4, %c0_5] : memref<128x128xf32, #tpu.memory_space<vmem>>, vector<128x128xf32>
    %cst = arith.constant dense<0.000000e+00> : vector<64x128xf32>
    %3 = tpu.matmul %0, %2, %cst {dimension_numbers = #tpu.dot_dimension_numbers<[1], [0], [0], [1], [0, 0, 1, 1], [], []>} : vector<64x128xf32>, vector<128x128xf32>, vector<64x128xf32> -> vector<64x128xf32>
    %4 = vector.extract_strided_slice %1 {offsets = [0, 3, 0], sizes = [4, 1, 128], strides = [1, 1, 1]} : vector<4x8x128xf32> to vector<4x1x128xf32>
    %5 = vector.shape_cast %4 : vector<4x1x128xf32> to vector<4x1x128xf32>
    %6 = vector.broadcast %5 : vector<4x1x128xf32> to vector<4x16x128xf32>
    %7 = vector.shape_cast %6 : vector<4x16x128xf32> to vector<64x128xf32>
    %8 = arith.addf %3, %7 : vector<64x128xf32>
    %cst_6 = arith.constant 0.000000e+00 : f32
    %9 = vector.broadcast %cst_6 : f32 to vector<64x128xf32>
    %10 = arith.maximumf %8, %9 : vector<64x128xf32>
    %11 = vector.extract_strided_slice %1 {offsets = [0, 5, 0], sizes = [4, 1, 128], strides = [1, 1, 1]} : vector<4x8x128xf32> to vector<4x1x128xf32>
    %12 = vector.shape_cast %11 : vector<4x1x128xf32> to vector<4x1x128xf32>
    %13 = vector.broadcast %12 : vector<4x1x128xf32> to vector<4x16x128xf32>
    %14 = vector.shape_cast %13 : vector<4x16x128xf32> to vector<64x128xf32>
    %15 = arith.addf %3, %14 : vector<64x128xf32>
    %cst_7 = arith.constant 0.000000e+00 : f32
    %16 = vector.broadcast %cst_7 : f32 to vector<64x128xf32>
    %17 = arith.maximumf %15, %16 : vector<64x128xf32>
    %c0_8 = arith.constant 0 : index
    %c0_9 = arith.constant 0 : index
    %18 = vector.load %arg4[%c0_8, %c0_9] : memref<128x128xf32, #tpu.memory_space<vmem>>, vector<128x128xf32>
    %cst_10 = arith.constant dense<0.000000e+00> : vector<64x128xf32>
    %19 = tpu.matmul %10, %18, %cst_10 {dimension_numbers = #tpu.dot_dimension_numbers<[1], [0], [0], [1], [0, 0, 1, 1], [], []>} : vector<64x128xf32>, vector<128x128xf32>, vector<64x128xf32> -> vector<64x128xf32>
    %c0_11 = arith.constant 0 : index
    %c0_12 = arith.constant 0 : index
    %20 = vector.load %arg4[%c0_11, %c0_12] : memref<128x128xf32, #tpu.memory_space<vmem>>, vector<128x128xf32>
    %cst_13 = arith.constant dense<0.000000e+00> : vector<64x128xf32>
    %21 = tpu.matmul %17, %20, %cst_13 {dimension_numbers = #tpu.dot_dimension_numbers<[1], [0], [0], [1], [0, 0, 1, 1], [], []>} : vector<64x128xf32>, vector<128x128xf32>, vector<64x128xf32> -> vector<64x128xf32>
    %22 = vector.extract_strided_slice %1 {offsets = [0, 2, 0], sizes = [4, 1, 128], strides = [1, 1, 1]} : vector<4x8x128xf32> to vector<4x1x128xf32>
    %23 = vector.shape_cast %22 : vector<4x1x128xf32> to vector<4x1x128xf32>
    %24 = vector.broadcast %23 : vector<4x1x128xf32> to vector<4x16x128xf32>
    %25 = vector.shape_cast %24 : vector<4x16x128xf32> to vector<64x128xf32>
    %26 = arith.addf %19, %25 : vector<64x128xf32>
    %cst_14 = arith.constant 0.000000e+00 : f32
    %27 = vector.broadcast %cst_14 : f32 to vector<64x128xf32>
    %28 = arith.maximumf %26, %27 : vector<64x128xf32>
    %29 = vector.extract_strided_slice %1 {offsets = [0, 4, 0], sizes = [4, 1, 128], strides = [1, 1, 1]} : vector<4x8x128xf32> to vector<4x1x128xf32>
    %30 = vector.shape_cast %29 : vector<4x1x128xf32> to vector<4x1x128xf32>
    %31 = vector.broadcast %30 : vector<4x1x128xf32> to vector<4x16x128xf32>
    %32 = vector.shape_cast %31 : vector<4x16x128xf32> to vector<64x128xf32>
    %33 = arith.addf %21, %32 : vector<64x128xf32>
    %cst_15 = arith.constant 0.000000e+00 : f32
    %34 = vector.broadcast %cst_15 : f32 to vector<64x128xf32>
    %35 = arith.maximumf %33, %34 : vector<64x128xf32>
    %36 = vector.extract_strided_slice %1 {offsets = [0, 6, 0], sizes = [4, 1, 128], strides = [1, 1, 1]} : vector<4x8x128xf32> to vector<4x1x128xf32>
    %37 = vector.shape_cast %36 : vector<4x1x128xf32> to vector<4x1x128xf32>
    %38 = vector.broadcast %37 : vector<4x1x128xf32> to vector<4x16x128xf32>
    %39 = vector.shape_cast %38 : vector<4x16x128xf32> to vector<64x128xf32>
    %40 = arith.mulf %35, %39 : vector<64x128xf32>
    %41 = arith.addf %28, %40 : vector<64x128xf32>
    %c0_16 = arith.constant 0 : index
    %c0_17 = arith.constant 0 : index
    %42 = vector.load %arg5[%c0_16, %c0_17] : memref<128x128xf32, #tpu.memory_space<vmem>>, vector<128x128xf32>
    %cst_18 = arith.constant dense<0.000000e+00> : vector<64x128xf32>
    %43 = tpu.matmul %41, %42, %cst_18 {dimension_numbers = #tpu.dot_dimension_numbers<[1], [0], [0], [1], [0, 0, 1, 1], [], []>} : vector<64x128xf32>, vector<128x128xf32>, vector<64x128xf32> -> vector<64x128xf32>
    %44 = vector.extract_strided_slice %1 {offsets = [0, 1, 0], sizes = [4, 1, 128], strides = [1, 1, 1]} : vector<4x8x128xf32> to vector<4x1x128xf32>
    %45 = vector.shape_cast %44 : vector<4x1x128xf32> to vector<4x1x128xf32>
    %46 = vector.broadcast %45 : vector<4x1x128xf32> to vector<4x16x128xf32>
    %47 = vector.shape_cast %46 : vector<4x16x128xf32> to vector<64x128xf32>
    %48 = arith.addf %43, %47 : vector<64x128xf32>
    %cst_19 = arith.constant 0.000000e+00 : f32
    %49 = vector.broadcast %cst_19 : f32 to vector<64x128xf32>
    %50 = arith.maximumf %48, %49 : vector<64x128xf32>
    %c0_20 = arith.constant 0 : index
    %c0_21 = arith.constant 0 : index
    %51 = vector.load %arg6[%c0_20, %c0_21] : memref<128x128xf32, #tpu.memory_space<vmem>>, vector<128x128xf32>
    %cst_22 = arith.constant dense<0.000000e+00> : vector<64x128xf32>
    %52 = tpu.matmul %50, %51, %cst_22 {dimension_numbers = #tpu.dot_dimension_numbers<[1], [0], [0], [1], [0, 0, 1, 1], [], []>} : vector<64x128xf32>, vector<128x128xf32>, vector<64x128xf32> -> vector<64x128xf32>
    %53 = vector.extract_strided_slice %1 {offsets = [0, 0, 0], sizes = [4, 1, 128], strides = [1, 1, 1]} : vector<4x8x128xf32> to vector<4x1x128xf32>
    %54 = vector.shape_cast %53 : vector<4x1x128xf32> to vector<4x1x128xf32>
    %55 = vector.broadcast %54 : vector<4x1x128xf32> to vector<4x16x128xf32>
    %56 = vector.shape_cast %55 : vector<4x16x128xf32> to vector<64x128xf32>
    %57 = arith.addf %52, %56 : vector<64x128xf32>
    %cst_23 = arith.constant 0.000000e+00 : f32
    %58 = vector.broadcast %cst_23 : f32 to vector<64x128xf32>
    %59 = arith.maximumf %57, %58 : vector<64x128xf32>
    %c0_24 = arith.constant 0 : index
    %c0_25 = arith.constant 0 : index
    %60 = vector.load %arg7[%c0_24, %c0_25] : memref<64x128xf32, #tpu.memory_space<vmem>>, vector<64x128xf32>
    tpu.vector_store %arg7[%c0_24, %c0_25], %59 {strides = array<i32>} : memref<64x128xf32, #tpu.memory_space<vmem>>, vector<64x128xf32>,
    return
  }
  func.func @transform_0(%arg0: i32) -> (i32, i32) {
    %c0_i32 = arith.constant 0 : i32
    %c0_i32_0 = arith.constant 0 : i32
    return %arg0, %c0_i32 : i32, i32
  }
  func.func @transform_1(%arg0: i32) -> (i32, i32, i32) {
    %c0_i32 = arith.constant 0 : i32
    %c0_i32_0 = arith.constant 0 : i32
    %c0_i32_1 = arith.constant 0 : i32
    return %arg0, %c0_i32, %c0_i32_0 : i32, i32, i32
  }
  func.func @transform_2(%arg0: i32) -> (i32, i32) {
    %c0_i32 = arith.constant 0 : i32
    %c0_i32_0 = arith.constant 0 : i32
    %c0_i32_1 = arith.constant 0 : i32
    return %c0_i32, %c0_i32_0 : i32, i32
  }
  func.func @transform_3(%arg0: i32) -> (i32, i32) {
    %c0_i32 = arith.constant 0 : i32
    %c0_i32_0 = arith.constant 0 : i32
    %c0_i32_1 = arith.constant 0 : i32
    return %c0_i32, %c0_i32_0 : i32, i32
  }
  func.func @transform_4(%arg0: i32) -> (i32, i32) {
    %c0_i32 = arith.constant 0 : i32
    %c0_i32_0 = arith.constant 0 : i32
    %c0_i32_1 = arith.constant 0 : i32
    return %c0_i32, %c0_i32_0 : i32, i32
  }
  func.func @transform_5(%arg0: i32) -> (i32, i32) {
    %c0_i32 = arith.constant 0 : i32
    %c0_i32_0 = arith.constant 0 : i32
    %c0_i32_1 = arith.constant 0 : i32
    return %c0_i32, %c0_i32_0 : i32, i32
  }
  func.func @transform_6(%arg0: i32) -> (i32, i32) {
    %c0_i32 = arith.constant 0 : i32
    %c0_i32_0 = arith.constant 0 : i32
    return %arg0, %c0_i32 : i32, i32
  }
}

</mosaic_0001>

<llo_original>
// kernel: fctree_forward.1
$region0: #{fctree_forward.1}
  #allocation0 [shape = 'u32[]', space=smem, size = 0x4, offset = 0x4, fixed_abs, tag = 'smem constant byte address 0x4 - core index']
  #allocation1 [shape = 'u32[144,128]{1,0:T(1,128)}', space=vmem, size = 0x12000, scoped, tag = 'internal scratch']
  %s0 = inlined_call_operand.vmem [shape: f32[64,128], index: 0, kind: input, shape index: {}]
  %s1 = inlined_call_operand.vmem [shape: f32[4,8,128], index: 1, kind: input, shape index: {}]
  %s2 = inlined_call_operand.vmem [shape: f32[128,128], index: 2, kind: input, shape index: {}]
  %s3 = inlined_call_operand.vmem [shape: f32[128,128], index: 3, kind: input, shape index: {}]
  %s4 = inlined_call_operand.vmem [shape: f32[128,128], index: 4, kind: input, shape index: {}]
  %s5 = inlined_call_operand.vmem [shape: f32[128,128], index: 5, kind: input, shape index: {}]
  %s6 = inlined_call_operand.hbm [shape: f32[64,128], index: 6, kind: output, shape index: {}]
  %s7 = sld [smem:[#allocation0]]
  $region34: #{fctree_forward.1} parent=0
    _
  %s9 = ssub.s32 1, %s7
  %s10 = scalar_select 0, %s9, %s7
  $region1: #{fctree_forward.1} parent=0
    #allocation2 [shape = 'u8[32768]{0}', space=vmem, size = 0x8000, scoped, tag = 'output window, operand 0, single buffered']
    #allocation3 [shape = 's32[1]{0}', space=sflag, size = 0x4, scoped, tag = 'scoped memory for fctree_forward.1']
    %11 = vsyncpa [#allocation3], 0
    // Predicated region
    $region2: #{fctree_forward.1} parent=1 // pred_check
      _
    $region3: #{fctree_forward.1} parent=1 // pred_check_branch
      %13 = sbr.rel (0) target = $region5
    $region4: #{fctree_forward.1} parent=1 // pred_region
      _
    $region5: #{fctree_forward.1} parent=1 // pred_fallthru
      _
    // Predicated region
    $region6: #{fctree_forward.1} parent=1 // pred_check
      _
    $region7: #{fctree_forward.1} parent=1 // pred_check_branch
      %15 = sbr.rel (0) target = $region9
    $region8: #{fctree_forward.1} parent=1 // pred_region
      _
    $region9: #{fctree_forward.1} parent=1 // pred_fallthru
      _
    // Predicated region
    $region10: #{fctree_forward.1} parent=1 // pred_check
      _
    $region11: #{fctree_forward.1} parent=1 // pred_check_branch
      %17 = sbr.rel (0) target = $region13
    $region12: #{fctree_forward.1} parent=1 // pred_region
      _
    $region13: #{fctree_forward.1} parent=1 // pred_fallthru
      _
    // Predicated region
    $region14: #{fctree_forward.1} parent=1 // pred_check
      _
    $region15: #{fctree_forward.1} parent=1 // pred_check_branch
      %19 = sbr.rel (0) target = $region17
    $region16: #{fctree_forward.1} parent=1 // pred_region
      _
    $region17: #{fctree_forward.1} parent=1 // pred_fallthru
      _
    // Predicated region
    $region18: #{fctree_forward.1} parent=1 // pred_check
      _
    $region19: #{fctree_forward.1} parent=1 // pred_check_branch
      %21 = sbr.rel (0) target = $region21
    $region20: #{fctree_forward.1} parent=1 // pred_region
      _
    $region21: #{fctree_forward.1} parent=1 // pred_fallthru
      _
    // Predicated region
    $region22: #{fctree_forward.1} parent=1 // pred_check
      _
    $region23: #{fctree_forward.1} parent=1 // pred_check_branch
      %23 = sbr.rel (0) target = $region25
    $region24: #{fctree_forward.1} parent=1 // pred_region
      _
    $region25: #{fctree_forward.1} parent=1 // pred_fallthru
      _
    %v24 = vld [vmem:[%s0] sm:$0xff]
    %v25 = vld [vmem:[%s0 + $0x8] sm:$0xff]
    %v26 = vld [vmem:[%s0 + $0x10] sm:$0xff]
    %v27 = vld [vmem:[%s0 + $0x18] sm:$0xff]
    %v28 = vld [vmem:[%s0 + $0x20] sm:$0xff]
    %v29 = vld [vmem:[%s0 + $0x28] sm:$0xff]
    %v30 = vld [vmem:[%s0 + $0x30] sm:$0xff]
    %v31 = vld [vmem:[%s0 + $0x38] sm:$0xff]
    %v32 = vld [vmem:[%s1] sm:$0xff]
    %v33 = vld [vmem:[%s1 + $0x8] sm:$0xff]
    %v34 = vld [vmem:[%s1 + $0x10] sm:$0xff]
    %v35 = vld [vmem:[%s1 + $0x18] sm:$0xff]
    %v36 = vld [vmem:[%s2] sm:$0xff]
    %v37 = vld [vmem:[%s2 + $0x8] sm:$0xff]
    %v38 = vld [vmem:[%s2 + $0x10] sm:$0xff]
    %v39 = vld [vmem:[%s2 + $0x18] sm:$0xff]
    %v40 = vld [vmem:[%s2 + $0x20] sm:$0xff]
    %v41 = vld [vmem:[%s2 + $0x28] sm:$0xff]
    %v42 = vld [vmem:[%s2 + $0x30] sm:$0xff]
    %v43 = vld [vmem:[%s2 + $0x38] sm:$0xff]
    %v44 = vld [vmem:[%s2 + $0x40] sm:$0xff]
    %v45 = vld [vmem:[%s2 + $0x48] sm:$0xff]
    %v46 = vld [vmem:[%s2 + $0x50] sm:$0xff]
    %v47 = vld [vmem:[%s2 + $0x58] sm:$0xff]
    %v48 = vld [vmem:[%s2 + $0x60] sm:$0xff]
    %v49 = vld [vmem:[%s2 + $0x68] sm:$0xff]
    %v50 = vld [vmem:[%s2 + $0x70] sm:$0xff]
    %v51 = vld [vmem:[%s2 + $0x78] sm:$0xff]
    %52 = vmatprep.subr.mxu0 0.0
    %53 = vmatpush1.msra.mxu0 %v36
    %54 = vmatprep.subr.mxu0 0.0
    %55 = vmatpush1.msra.mxu0 %v37
    %56 = vmatprep.subr.mxu0 0.0
    %57 = vmatpush1.msra.mxu0 %v38
    %58 = vmatprep.subr.mxu0 0.0
    %59 = vmatpush1.msra.mxu0 %v39
    %60 = vmatprep.subr.mxu0 0.0
    %61 = vmatpush1.msra.mxu0 %v40
    %62 = vmatprep.subr.mxu0 0.0
    %63 = vmatpush1.msra.mxu0 %v41
    %64 = vmatprep.subr.mxu0 0.0
    %65 = vmatpush1.msra.mxu0 %v42
    %66 = vmatprep.subr.mxu0 0.0
    %67 = vmatpush1.msra.mxu0 %v43
    %68 = vmatprep.subr.mxu0 0.0
    %69 = vmatpush1.msra.mxu0 %v44
    %70 = vmatprep.subr.mxu0 0.0
    %71 = vmatpush1.msra.mxu0 %v45
    %72 = vmatprep.subr.mxu0 0.0
    %73 = vmatpush1.msra.mxu0 %v46
    %74 = vmatprep.subr.mxu0 0.0
    %75 = vmatpush1.msra.mxu0 %v47
    %76 = vmatprep.subr.mxu0 0.0
    %77 = vmatpush1.msra.mxu0 %v48
    %78 = vmatprep.subr.mxu0 0.0
    %79 = vmatpush1.msra.mxu0 %v49
    %80 = vmatprep.subr.mxu0 0.0
    %81 = vmatpush1.msra.mxu0 %v50
    %82 = vmatprep.subr.mxu0 0.0
    %83 = vmatpush1.msra.mxu0 %v51
    %84 = vmatprep.subr.mxu0 0.0
    %85 = vmatpush1.msra.mxu0 0.0
    %86 = vmatprep.subr.mxu0 0.0
    %87 = vmatpush1.msra.mxu0 0.0
    %88 = vmatprep.subr.mxu0 0.0
    %89 = vmatpush1.msra.mxu0 0.0
    %90 = vmatprep.subr.mxu0 0.0
    %91 = vmatpush1.msra.mxu0 0.0
    %92 = vmatprep.subr.mxu0 0.0
    %93 = vmatpush1.msra.mxu0 0.0
    %94 = vmatprep.subr.mxu0 0.0
    %95 = vmatpush1.msra.mxu0 0.0
    %96 = vmatprep.subr.mxu0 0.0
    %97 = vmatpush1.msra.mxu0 0.0
    %98 = vmatprep.subr.mxu0 0.0
    %99 = vmatpush1.msra.mxu0 0.0
    %100 = vmatprep.subr.mxu0 0.0
    %101 = vmatpush1.msra.mxu0 0.0
    %102 = vmatprep.subr.mxu0 0.0
    %103 = vmatpush1.msra.mxu0 0.0
    %104 = vmatprep.subr.mxu0 0.0
    %105 = vmatpush1.msra.mxu0 0.0
    %106 = vmatprep.subr.mxu0 0.0
    %107 = vmatpush1.msra.mxu0 0.0
    %108 = vmatprep.subr.mxu0 0.0
    %109 = vmatpush1.msra.mxu0 0.0
    %110 = vmatprep.subr.mxu0 0.0
    %111 = vmatpush1.msra.mxu0 0.0
    %112 = vmatprep.subr.mxu0 0.0
    %113 = vmatpush1.msra.mxu0 0.0
    %114 = vmatprep.subr.mxu0 0.0
    %115 = vmatpush1.msra.mxu0 0.0
    %116 = vmatprep.mubr.f32.mxu0 0.0
    %117 = vmatmul.mubr.f32.gmra.mrb[0].mxu0 %v24
    %v118 = vpop.f32.mrb[0].mxu0
    %v119 = vadd.f32 0.0, %v118
    %v120 = vpop.f32.mrb[0].mxu0
    %121 = vmatprep.mubr.f32.mxu0 0.0
    %122 = vmatmul.mubr.f32.gmra.mrb[0].mxu0 %v25
    %v123 = vpop.f32.mrb[0].mxu0
    %v124 = vadd.f32 0.0, %v123
    %v125 = vpop.f32.mrb[0].mxu0
    %126 = vmatprep.mubr.f32.mxu0 0.0
    %127 = vmatmul.mubr.f32.gmra.mrb[0].mxu0 %v26
    %v128 = vpop.f32.mrb[0].mxu0
    %v129 = vadd.f32 0.0, %v128
    %v130 = vpop.f32.mrb[0].mxu0
    %131 = vmatprep.mubr.f32.mxu0 0.0
    %132 = vmatmul.mubr.f32.gmra.mrb[0].mxu0 %v27
    %v133 = vpop.f32.mrb[0].mxu0
    %v134 = vadd.f32 0.0, %v133
    %v135 = vpop.f32.mrb[0].mxu0
    %136 = vmatprep.mubr.f32.mxu0 0.0
    %137 = vmatmul.mubr.f32.gmra.mrb[0].mxu0 %v28
    %v138 = vpop.f32.mrb[0].mxu0
    %v139 = vadd.f32 0.0, %v138
    %v140 = vpop.f32.mrb[0].mxu0
    %141 = vmatprep.mubr.f32.mxu0 0.0
    %142 = vmatmul.mubr.f32.gmra.mrb[0].mxu0 %v29
    %v143 = vpop.f32.mrb[0].mxu0
    %v144 = vadd.f32 0.0, %v143
    %v145 = vpop.f32.mrb[0].mxu0
    %146 = vmatprep.mubr.f32.mxu0 0.0
    %147 = vmatmul.mubr.f32.gmra.mrb[0].mxu0 %v30
    %v148 = vpop.f32.mrb[0].mxu0
    %v149 = vadd.f32 0.0, %v148
    %v150 = vpop.f32.mrb[0].mxu0
    %151 = vmatprep.mubr.f32.mxu0 0.0
    %152 = vmatmul.mubr.f32.gmra.mrb[0].mxu0 %v31
    %v153 = vpop.f32.mrb[0].mxu0
    %v154 = vadd.f32 0.0, %v153
    %v155 = vpop.f32.mrb[0].mxu0
    %156 = vdwg.mxu0
    %v157 = vlaneseq
    %v158 = vshrl.u32 %v157, 7
    %v159 = vsub.s32 3, %v158
    %v160 = vrot.slane %v32, %v159
    %v161 = vlaneseq
    %v162 = vshrl.u32 %v161, 7
    %v163 = vsub.s32 3, %v162
    %v164 = vrot.slane %v33, %v163
    %v165 = vlaneseq
    %v166 = vshrl.u32 %v165, 7
    %v167 = vsub.s32 3, %v166
    %v168 = vrot.slane %v34, %v167
    %v169 = vlaneseq
    %v170 = vshrl.u32 %v169, 7
    %v171 = vsub.s32 3, %v170
    %v172 = vrot.slane %v35, %v171
    %v173 = vadd.f32 %v119, %v160
    %v174 = vadd.f32 %v124, %v160
    %v175 = vadd.f32 %v129, %v164
    %v176 = vadd.f32 %v134, %v164
    %v177 = vadd.f32 %v139, %v168
    %v178 = vadd.f32 %v144, %v168
    %v179 = vadd.f32 %v149, %v172
    %v180 = vadd.f32 %v154, %v172
    %v181 = vmax.f32 %v173, 0.0
    %v182 = vmax.f32 %v174, 0.0
    %v183 = vmax.f32 %v175, 0.0
    %v184 = vmax.f32 %v176, 0.0
    %v185 = vmax.f32 %v177, 0.0
    %v186 = vmax.f32 %v178, 0.0
    %v187 = vmax.f32 %v179, 0.0
    %v188 = vmax.f32 %v180, 0.0
    %v189 = vlaneseq
    %v190 = vshrl.u32 %v189, 7
    %v191 = vsub.s32 5, %v190
    %v192 = vrot.slane %v32, %v191
    %v193 = vlaneseq
    %v194 = vshrl.u32 %v193, 7
    %v195 = vsub.s32 5, %v194
    %v196 = vrot.slane %v33, %v195
    %v197 = vlaneseq
    %v198 = vshrl.u32 %v197, 7
    %v199 = vsub.s32 5, %v198
    %v200 = vrot.slane %v34, %v199
    %v201 = vlaneseq
    %v202 = vshrl.u32 %v201, 7
    %v203 = vsub.s32 5, %v202
    %v204 = vrot.slane %v35, %v203
    %v205 = vadd.f32 %v119, %v192
    %v206 = vadd.f32 %v124, %v192
    %v207 = vadd.f32 %v129, %v196
    %v208 = vadd.f32 %v134, %v196
    %v209 = vadd.f32 %v139, %v200
    %v210 = vadd.f32 %v144, %v200
    %v211 = vadd.f32 %v149, %v204
    %v212 = vadd.f32 %v154, %v204
    %v213 = vmax.f32 %v205, 0.0
    %v214 = vmax.f32 %v206, 0.0
    %v215 = vmax.f32 %v207, 0.0
    %v216 = vmax.f32 %v208, 0.0
    %v217 = vmax.f32 %v209, 0.0
    %v218 = vmax.f32 %v210, 0.0
    %v219 = vmax.f32 %v211, 0.0
    %v220 = vmax.f32 %v212, 0.0
    %v221 = vld [vmem:[%s3] sm:$0xff]
    %v222 = vld [vmem:[%s3 + $0x8] sm:$0xff]
    %v223 = vld [vmem:[%s3 + $0x10] sm:$0xff]
    %v224 = vld [vmem:[%s3 + $0x18] sm:$0xff]
    %v225 = vld [vmem:[%s3 + $0x20] sm:$0xff]
    %v226 = vld [vmem:[%s3 + $0x28] sm:$0xff]
    %v227 = vld [vmem:[%s3 + $0x30] sm:$0xff]
    %v228 = vld [vmem:[%s3 + $0x38] sm:$0xff]
    %v229 = vld [vmem:[%s3 + $0x40] sm:$0xff]
    %v230 = vld [vmem:[%s3 + $0x48] sm:$0xff]
    %v231 = vld [vmem:[%s3 + $0x50] sm:$0xff]
    %v232 = vld [vmem:[%s3 + $0x58] sm:$0xff]
    %v233 = vld [vmem:[%s3 + $0x60] sm:$0xff]
    %v234 = vld [vmem:[%s3 + $0x68] sm:$0xff]
    %v235 = vld [vmem:[%s3 + $0x70] sm:$0xff]
    %v236 = vld [vmem:[%s3 + $0x78] sm:$0xff]
    %v237 = vlaneseq
    %v238 = vshrl.u32 %v237, 7
    %v239 = vsub.s32 2, %v238
    %v240 = vrot.slane %v32, %v239
    %v241 = vlaneseq
    %v242 = vshrl.u32 %v241, 7
    %v243 = vsub.s32 2, %v242
    %v244 = vrot.slane %v33, %v243
    %v245 = vlaneseq
    %v246 = vshrl.u32 %v245, 7
    %v247 = vsub.s32 2, %v246
    %v248 = vrot.slane %v34, %v247
    %v249 = vlaneseq
    %v250 = vshrl.u32 %v249, 7
    %v251 = vsub.s32 2, %v250
    %v252 = vrot.slane %v35, %v251
    %253 = vmatprep.subr.mxu0 0.0
    %254 = vmatpush1.msra.mxu0 %v221
    %255 = vmatprep.subr.mxu0 0.0
    %256 = vmatpush1.msra.mxu0 %v222
    %257 = vmatprep.subr.mxu0 0.0
    %258 = vmatpush1.msra.mxu0 %v223
    %259 = vmatprep.subr.mxu0 0.0
    %260 = vmatpush1.msra.mxu0 %v224
    %261 = vmatprep.subr.mxu0 0.0
    %262 = vmatpush1.msra.mxu0 %v225
    %263 = vmatprep.subr.mxu0 0.0
    %264 = vmatpush1.msra.mxu0 %v226
    %265 = vmatprep.subr.mxu0 0.0
    %266 = vmatpush1.msra.mxu0 %v227
    %267 = vmatprep.subr.mxu0 0.0
    %268 = vmatpush1.msra.mxu0 %v228
    %269 = vmatprep.subr.mxu0 0.0
    %270 = vmatpush1.msra.mxu0 %v229
    %271 = vmatprep.subr.mxu0 0.0
    %272 = vmatpush1.msra.mxu0 %v230
    %273 = vmatprep.subr.mxu0 0.0
    %274 = vmatpush1.msra.mxu0 %v231
    %275 = vmatprep.subr.mxu0 0.0
    %276 = vmatpush1.msra.mxu0 %v232
    %277 = vmatprep.subr.mxu0 0.0
    %278 = vmatpush1.msra.mxu0 %v233
    %279 = vmatprep.subr.mxu0 0.0
    %280 = vmatpush1.msra.mxu0 %v234
    %281 = vmatprep.subr.mxu0 0.0
    %282 = vmatpush1.msra.mxu0 %v235
    %283 = vmatprep.subr.mxu0 0.0
    %284 = vmatpush1.msra.mxu0 %v236
    %285 = vmatprep.subr.mxu0 0.0
    %286 = vmatpush1.msra.mxu0 0.0
    %287 = vmatprep.subr.mxu0 0.0
    %288 = vmatpush1.msra.mxu0 0.0
    %289 = vmatprep.subr.mxu0 0.0
    %290 = vmatpush1.msra.mxu0 0.0
    %291 = vmatprep.subr.mxu0 0.0
    %292 = vmatpush1.msra.mxu0 0.0
    %293 = vmatprep.subr.mxu0 0.0
    %294 = vmatpush1.msra.mxu0 0.0
    %295 = vmatprep.subr.mxu0 0.0
    %296 = vmatpush1.msra.mxu0 0.0
    %297 = vmatprep.subr.mxu0 0.0
    %298 = vmatpush1.msra.mxu0 0.0
    %299 = vmatprep.subr.mxu0 0.0
    %300 = vmatpush1.msra.mxu0 0.0
    %301 = vmatprep.subr.mxu0 0.0
    %302 = vmatpush1.msra.mxu0 0.0
    %303 = vmatprep.subr.mxu0 0.0
    %304 = vmatpush1.msra.mxu0 0.0
    %305 = vmatprep.subr.mxu0 0.0
    %306 = vmatpush1.msra.mxu0 0.0
    %307 = vmatprep.subr.mxu0 0.0
    %308 = vmatpush1.msra.mxu0 0.0
    %309 = vmatprep.subr.mxu0 0.0
    %310 = vmatpush1.msra.mxu0 0.0
    %311 = vmatprep.subr.mxu0 0.0
    %312 = vmatpush1.msra.mxu0 0.0
    %313 = vmatprep.subr.mxu0 0.0
    %314 = vmatpush1.msra.mxu0 0.0
    %315 = vmatprep.subr.mxu0 0.0
    %316 = vmatpush1.msra.mxu0 0.0
    %317 = vmatprep.mubr.f32.mxu0 0.0
    %318 = vmatmul.mubr.f32.gmra.mrb[0].mxu0 %v181
    %v319 = vpop.f32.mrb[0].mxu0
    %v320 = vadd.f32 %v240, %v319
    %v321 = vpop.f32.mrb[0].mxu0
    %322 = vmatprep.mubr.f32.mxu0 0.0
    %323 = vmatmul.mubr.f32.gmra.mrb[0].mxu0 %v182
    %v324 = vpop.f32.mrb[0].mxu0
    %v325 = vadd.f32 %v240, %v324
    %v326 = vpop.f32.mrb[0].mxu0
    %327 = vmatprep.mubr.f32.mxu0 0.0
    %328 = vmatmul.mubr.f32.gmra.mrb[0].mxu0 %v183
    %v329 = vpop.f32.mrb[0].mxu0
    %v330 = vadd.f32 %v244, %v329
    %v331 = vpop.f32.mrb[0].mxu0
    %332 = vmatprep.mubr.f32.mxu0 0.0
    %333 = vmatmul.mubr.f32.gmra.mrb[0].mxu0 %v184
    %v334 = vpop.f32.mrb[0].mxu0
    %v335 = vadd.f32 %v244, %v334
    %v336 = vpop.f32.mrb[0].mxu0
    %337 = vmatprep.mubr.f32.mxu0 0.0
    %338 = vmatmul.mubr.f32.gmra.mrb[0].mxu0 %v185
    %v339 = vpop.f32.mrb[0].mxu0
    %v340 = vadd.f32 %v248, %v339
    %v341 = vpop.f32.mrb[0].mxu0
    %342 = vmatprep.mubr.f32.mxu0 0.0
    %343 = vmatmul.mubr.f32.gmra.mrb[0].mxu0 %v186
    %v344 = vpop.f32.mrb[0].mxu0
    %v345 = vadd.f32 %v248, %v344
    %v346 = vpop.f32.mrb[0].mxu0
    %347 = vmatprep.mubr.f32.mxu0 0.0
    %348 = vmatmul.mubr.f32.gmra.mrb[0].mxu0 %v187
    %v349 = vpop.f32.mrb[0].mxu0
    %v350 = vadd.f32 %v252, %v349
    %v351 = vpop.f32.mrb[0].mxu0
    %352 = vmatprep.mubr.f32.mxu0 0.0
    %353 = vmatmul.mubr.f32.gmra.mrb[0].mxu0 %v188
    %v354 = vpop.f32.mrb[0].mxu0
    %v355 = vadd.f32 %v252, %v354
    %v356 = vpop.f32.mrb[0].mxu0
    %357 = vdwg.mxu0
    %v358 = vmax.f32 %v320, 0.0
    %v359 = vmax.f32 %v325, 0.0
    %v360 = vmax.f32 %v330, 0.0
    %v361 = vmax.f32 %v335, 0.0
    %v362 = vmax.f32 %v340, 0.0
    %v363 = vmax.f32 %v345, 0.0
    %v364 = vmax.f32 %v350, 0.0
    %v365 = vmax.f32 %v355, 0.0
    %v366 = vlaneseq
    %v367 = vshrl.u32 %v366, 7
    %v368 = vsub.s32 4, %v367
    %v369 = vrot.slane %v32, %v368
    %v370 = vlaneseq
    %v371 = vshrl.u32 %v370, 7
    %v372 = vsub.s32 4, %v371
    %v373 = vrot.slane %v33, %v372
    %v374 = vlaneseq
    %v375 = vshrl.u32 %v374, 7
    %v376 = vsub.s32 4, %v375
    %v377 = vrot.slane %v34, %v376
    %v378 = vlaneseq
    %v379 = vshrl.u32 %v378, 7
    %v380 = vsub.s32 4, %v379
    %v381 = vrot.slane %v35, %v380
    %382 = vmatprep.subr.mxu0 0.0
    %383 = vmatpush1.msra.mxu0 %v221
    %384 = vmatprep.subr.mxu0 0.0
    %385 = vmatpush1.msra.mxu0 %v222
    %386 = vmatprep.subr.mxu0 0.0
    %387 = vmatpush1.msra.mxu0 %v223
    %388 = vmatprep.subr.mxu0 0.0
    %389 = vmatpush1.msra.mxu0 %v224
    %390 = vmatprep.subr.mxu0 0.0
    %391 = vmatpush1.msra.mxu0 %v225
    %392 = vmatprep.subr.mxu0 0.0
    %393 = vmatpush1.msra.mxu0 %v226
    %394 = vmatprep.subr.mxu0 0.0
    %395 = vmatpush1.msra.mxu0 %v227
    %396 = vmatprep.subr.mxu0 0.0
    %397 = vmatpush1.msra.mxu0 %v228
    %398 = vmatprep.subr.mxu0 0.0
    %399 = vmatpush1.msra.mxu0 %v229
    %400 = vmatprep.subr.mxu0 0.0
    %401 = vmatpush1.msra.mxu0 %v230
    %402 = vmatprep.subr.mxu0 0.0
    %403 = vmatpush1.msra.mxu0 %v231
    %404 = vmatprep.subr.mxu0 0.0
    %405 = vmatpush1.msra.mxu0 %v232
    %406 = vmatprep.subr.mxu0 0.0
    %407 = vmatpush1.msra.mxu0 %v233
    %408 = vmatprep.subr.mxu0 0.0
    %409 = vmatpush1.msra.mxu0 %v234
    %410 = vmatprep.subr.mxu0 0.0
    %411 = vmatpush1.msra.mxu0 %v235
    %412 = vmatprep.subr.mxu0 0.0
    %413 = vmatpush1.msra.mxu0 %v236
    %414 = vmatprep.subr.mxu0 0.0
    %415 = vmatpush1.msra.mxu0 0.0
    %416 = vmatprep.subr.mxu0 0.0
    %417 = vmatpush1.msra.mxu0 0.0
    %418 = vmatprep.subr.mxu0 0.0
    %419 = vmatpush1.msra.mxu0 0.0
    %420 = vmatprep.subr.mxu0 0.0
    %421 = vmatpush1.msra.mxu0 0.0
    %422 = vmatprep.subr.mxu0 0.0
    %423 = vmatpush1.msra.mxu0 0.0
    %424 = vmatprep.subr.mxu0 0.0
    %425 = vmatpush1.msra.mxu0 0.0
    %426 = vmatprep.subr.mxu0 0.0
    %427 = vmatpush1.msra.mxu0 0.0
    %428 = vmatprep.subr.mxu0 0.0
    %429 = vmatpush1.msra.mxu0 0.0
    %430 = vmatprep.subr.mxu0 0.0
    %431 = vmatpush1.msra.mxu0 0.0
    %432 = vmatprep.subr.mxu0 0.0
    %433 = vmatpush1.msra.mxu0 0.0
    %434 = vmatprep.subr.mxu0 0.0
    %435 = vmatpush1.msra.mxu0 0.0
    %436 = vmatprep.subr.mxu0 0.0
    %437 = vmatpush1.msra.mxu0 0.0
    %438 = vmatprep.subr.mxu0 0.0
    %439 = vmatpush1.msra.mxu0 0.0
    %440 = vmatprep.subr.mxu0 0.0
    %441 = vmatpush1.msra.mxu0 0.0
    %442 = vmatprep.subr.mxu0 0.0
    %443 = vmatpush1.msra.mxu0 0.0
    %444 = vmatprep.subr.mxu0 0.0
    %445 = vmatpush1.msra.mxu0 0.0
    %446 = vmatprep.mubr.f32.mxu0 0.0
    %447 = vmatmul.mubr.f32.gmra.mrb[0].mxu0 %v213
    %v448 = vpop.f32.mrb[0].mxu0
    %v449 = vadd.f32 %v369, %v448
    %v450 = vpop.f32.mrb[0].mxu0
    %451 = vmatprep.mubr.f32.mxu0 0.0
    %452 = vmatmul.mubr.f32.gmra.mrb[0].mxu0 %v214
    %v453 = vpop.f32.mrb[0].mxu0
    %v454 = vadd.f32 %v369, %v453
    %v455 = vpop.f32.mrb[0].mxu0
    %456 = vmatprep.mubr.f32.mxu0 0.0
    %457 = vmatmul.mubr.f32.gmra.mrb[0].mxu0 %v215
    %v458 = vpop.f32.mrb[0].mxu0
    %v459 = vadd.f32 %v373, %v458
    %v460 = vpop.f32.mrb[0].mxu0
    %461 = vmatprep.mubr.f32.mxu0 0.0
    %462 = vmatmul.mubr.f32.gmra.mrb[0].mxu0 %v216
    %v463 = vpop.f32.mrb[0].mxu0
    %v464 = vadd.f32 %v373, %v463
    %v465 = vpop.f32.mrb[0].mxu0
    %466 = vmatprep.mubr.f32.mxu0 0.0
    %467 = vmatmul.mubr.f32.gmra.mrb[0].mxu0 %v217
    %v468 = vpop.f32.mrb[0].mxu0
    %v469 = vadd.f32 %v377, %v468
    %v470 = vpop.f32.mrb[0].mxu0
    %471 = vmatprep.mubr.f32.mxu0 0.0
    %472 = vmatmul.mubr.f32.gmra.mrb[0].mxu0 %v218
    %v473 = vpop.f32.mrb[0].mxu0
    %v474 = vadd.f32 %v377, %v473
    %v475 = vpop.f32.mrb[0].mxu0
    %476 = vmatprep.mubr.f32.mxu0 0.0
    %477 = vmatmul.mubr.f32.gmra.mrb[0].mxu0 %v219
    %v478 = vpop.f32.mrb[0].mxu0
    %v479 = vadd.f32 %v381, %v478
    %v480 = vpop.f32.mrb[0].mxu0
    %481 = vmatprep.mubr.f32.mxu0 0.0
    %482 = vmatmul.mubr.f32.gmra.mrb[0].mxu0 %v220
    %v483 = vpop.f32.mrb[0].mxu0
    %v484 = vadd.f32 %v381, %v483
    %v485 = vpop.f32.mrb[0].mxu0
    %486 = vdwg.mxu0
    %v487 = vmax.f32 %v449, 0.0
    %v488 = vmax.f32 %v454, 0.0
    %v489 = vmax.f32 %v459, 0.0
    %v490 = vmax.f32 %v464, 0.0
    %v491 = vmax.f32 %v469, 0.0
    %v492 = vmax.f32 %v474, 0.0
    %v493 = vmax.f32 %v479, 0.0
    %v494 = vmax.f32 %v484, 0.0
    %v495 = vlaneseq
    %v496 = vshrl.u32 %v495, 7
    %v497 = vsub.s32 6, %v496
    %v498 = vrot.slane %v32, %v497
    %v499 = vlaneseq
    %v500 = vshrl.u32 %v499, 7
    %v501 = vsub.s32 6, %v500
    %v502 = vrot.slane %v33, %v501
    %v503 = vlaneseq
    %v504 = vshrl.u32 %v503, 7
    %v505 = vsub.s32 6, %v504
    %v506 = vrot.slane %v34, %v505
    %v507 = vlaneseq
    %v508 = vshrl.u32 %v507, 7
    %v509 = vsub.s32 6, %v508
    %v510 = vrot.slane %v35, %v509
    %v511 = vmul.f32 %v487, %v498
    %v512 = vmul.f32 %v488, %v498
    %v513 = vmul.f32 %v489, %v502
    %v514 = vmul.f32 %v490, %v502
    %v515 = vmul.f32 %v491, %v506
    %v516 = vmul.f32 %v492, %v506
    %v517 = vmul.f32 %v493, %v510
    %v518 = vmul.f32 %v494, %v510
    %v519 = vadd.f32 %v358, %v511
    %v520 = vadd.f32 %v359, %v512
    %v521 = vadd.f32 %v360, %v513
    %v522 = vadd.f32 %v361, %v514
    %v523 = vadd.f32 %v362, %v515
    %v524 = vadd.f32 %v363, %v516
    %v525 = vadd.f32 %v364, %v517
    %v526 = vadd.f32 %v365, %v518
    %v527 = vld [vmem:[%s4] sm:$0xff]
    %v528 = vld [vmem:[%s4 + $0x8] sm:$0xff]
    %v529 = vld [vmem:[%s4 + $0x10] sm:$0xff]
    %v530 = vld [vmem:[%s4 + $0x18] sm:$0xff]
    %v531 = vld [vmem:[%s4 + $0x20] sm:$0xff]
    %v532 = vld [vmem:[%s4 + $0x28] sm:$0xff]
    %v533 = vld [vmem:[%s4 + $0x30] sm:$0xff]
    %v534 = vld [vmem:[%s4 + $0x38] sm:$0xff]
    %v535 = vld [vmem:[%s4 + $0x40] sm:$0xff]
    %v536 = vld [vmem:[%s4 + $0x48] sm:$0xff]
    %v537 = vld [vmem:[%s4 + $0x50] sm:$0xff]
    %v538 = vld [vmem:[%s4 + $0x58] sm:$0xff]
    %v539 = vld [vmem:[%s4 + $0x60] sm:$0xff]
    %v540 = vld [vmem:[%s4 + $0x68] sm:$0xff]
    %v541 = vld [vmem:[%s4 + $0x70] sm:$0xff]
    %v542 = vld [vmem:[%s4 + $0x78] sm:$0xff]
    %v543 = vlaneseq
    %v544 = vshrl.u32 %v543, 7
    %v545 = vsub.s32 1, %v544
    %v546 = vrot.slane %v32, %v545
    %v547 = vlaneseq
    %v548 = vshrl.u32 %v547, 7
    %v549 = vsub.s32 1, %v548
    %v550 = vrot.slane %v33, %v549
    %v551 = vlaneseq
    %v552 = vshrl.u32 %v551, 7
    %v553 = vsub.s32 1, %v552
    %v554 = vrot.slane %v34, %v553
    %v555 = vlaneseq
    %v556 = vshrl.u32 %v555, 7
    %v557 = vsub.s32 1, %v556
    %v558 = vrot.slane %v35, %v557
    %559 = vmatprep.subr.mxu0 0.0
    %560 = vmatpush1.msra.mxu0 %v527
    %561 = vmatprep.subr.mxu0 0.0
    %562 = vmatpush1.msra.mxu0 %v528
    %563 = vmatprep.subr.mxu0 0.0
    %564 = vmatpush1.msra.mxu0 %v529
    %565 = vmatprep.subr.mxu0 0.0
    %566 = vmatpush1.msra.mxu0 %v530
    %567 = vmatprep.subr.mxu0 0.0
    %568 = vmatpush1.msra.mxu0 %v531
    %569 = vmatprep.subr.mxu0 0.0
    %570 = vmatpush1.msra.mxu0 %v532
    %571 = vmatprep.subr.mxu0 0.0
    %572 = vmatpush1.msra.mxu0 %v533
    %573 = vmatprep.subr.mxu0 0.0
    %574 = vmatpush1.msra.mxu0 %v534
    %575 = vmatprep.subr.mxu0 0.0
    %576 = vmatpush1.msra.mxu0 %v535
    %577 = vmatprep.subr.mxu0 0.0
    %578 = vmatpush1.msra.mxu0 %v536
    %579 = vmatprep.subr.mxu0 0.0
    %580 = vmatpush1.msra.mxu0 %v537
    %581 = vmatprep.subr.mxu0 0.0
    %582 = vmatpush1.msra.mxu0 %v538
    %583 = vmatprep.subr.mxu0 0.0
    %584 = vmatpush1.msra.mxu0 %v539
    %585 = vmatprep.subr.mxu0 0.0
    %586 = vmatpush1.msra.mxu0 %v540
    %587 = vmatprep.subr.mxu0 0.0
    %588 = vmatpush1.msra.mxu0 %v541
    %589 = vmatprep.subr.mxu0 0.0
    %590 = vmatpush1.msra.mxu0 %v542
    %591 = vmatprep.subr.mxu0 0.0
    %592 = vmatpush1.msra.mxu0 0.0
    %593 = vmatprep.subr.mxu0 0.0
    %594 = vmatpush1.msra.mxu0 0.0
    %595 = vmatprep.subr.mxu0 0.0
    %596 = vmatpush1.msra.mxu0 0.0
    %597 = vmatprep.subr.mxu0 0.0
    %598 = vmatpush1.msra.mxu0 0.0
    %599 = vmatprep.subr.mxu0 0.0
    %600 = vmatpush1.msra.mxu0 0.0
    %601 = vmatprep.subr.mxu0 0.0
    %602 = vmatpush1.msra.mxu0 0.0
    %603 = vmatprep.subr.mxu0 0.0
    %604 = vmatpush1.msra.mxu0 0.0
    %605 = vmatprep.subr.mxu0 0.0
    %606 = vmatpush1.msra.mxu0 0.0
    %607 = vmatprep.subr.mxu0 0.0
    %608 = vmatpush1.msra.mxu0 0.0
    %609 = vmatprep.subr.mxu0 0.0
    %610 = vmatpush1.msra.mxu0 0.0
    %611 = vmatprep.subr.mxu0 0.0
    %612 = vmatpush1.msra.mxu0 0.0
    %613 = vmatprep.subr.mxu0 0.0
    %614 = vmatpush1.msra.mxu0 0.0
    %615 = vmatprep.subr.mxu0 0.0
    %616 = vmatpush1.msra.mxu0 0.0
    %617 = vmatprep.subr.mxu0 0.0
    %618 = vmatpush1.msra.mxu0 0.0
    %619 = vmatprep.subr.mxu0 0.0
    %620 = vmatpush1.msra.mxu0 0.0
    %621 = vmatprep.subr.mxu0 0.0
    %622 = vmatpush1.msra.mxu0 0.0
    %623 = vmatprep.mubr.f32.mxu0 0.0
    %624 = vmatmul.mubr.f32.gmra.mrb[0].mxu0 %v519
    %v625 = vpop.f32.mrb[0].mxu0
    %v626 = vadd.f32 %v546, %v625
    %v627 = vpop.f32.mrb[0].mxu0
    %628 = vmatprep.mubr.f32.mxu0 0.0
    %629 = vmatmul.mubr.f32.gmra.mrb[0].mxu0 %v520
    %v630 = vpop.f32.mrb[0].mxu0
    %v631 = vadd.f32 %v546, %v630
    %v632 = vpop.f32.mrb[0].mxu0
    %633 = vmatprep.mubr.f32.mxu0 0.0
    %634 = vmatmul.mubr.f32.gmra.mrb[0].mxu0 %v521
    %v635 = vpop.f32.mrb[0].mxu0
    %v636 = vadd.f32 %v550, %v635
    %v637 = vpop.f32.mrb[0].mxu0
    %638 = vmatprep.mubr.f32.mxu0 0.0
    %639 = vmatmul.mubr.f32.gmra.mrb[0].mxu0 %v522
    %v640 = vpop.f32.mrb[0].mxu0
    %v641 = vadd.f32 %v550, %v640
    %v642 = vpop.f32.mrb[0].mxu0
    %643 = vmatprep.mubr.f32.mxu0 0.0
    %644 = vmatmul.mubr.f32.gmra.mrb[0].mxu0 %v523
    %v645 = vpop.f32.mrb[0].mxu0
    %v646 = vadd.f32 %v554, %v645
    %v647 = vpop.f32.mrb[0].mxu0
    %648 = vmatprep.mubr.f32.mxu0 0.0
    %649 = vmatmul.mubr.f32.gmra.mrb[0].mxu0 %v524
    %v650 = vpop.f32.mrb[0].mxu0
    %v651 = vadd.f32 %v554, %v650
    %v652 = vpop.f32.mrb[0].mxu0
    %653 = vmatprep.mubr.f32.mxu0 0.0
    %654 = vmatmul.mubr.f32.gmra.mrb[0].mxu0 %v525
    %v655 = vpop.f32.mrb[0].mxu0
    %v656 = vadd.f32 %v558, %v655
    %v657 = vpop.f32.mrb[0].mxu0
    %658 = vmatprep.mubr.f32.mxu0 0.0
    %659 = vmatmul.mubr.f32.gmra.mrb[0].mxu0 %v526
    %v660 = vpop.f32.mrb[0].mxu0
    %v661 = vadd.f32 %v558, %v660
    %v662 = vpop.f32.mrb[0].mxu0
    %663 = vdwg.mxu0
    %v664 = vmax.f32 %v626, 0.0
    %v665 = vmax.f32 %v631, 0.0
    %v666 = vmax.f32 %v636, 0.0
    %v667 = vmax.f32 %v641, 0.0
    %v668 = vmax.f32 %v646, 0.0
    %v669 = vmax.f32 %v651, 0.0
    %v670 = vmax.f32 %v656, 0.0
    %v671 = vmax.f32 %v661, 0.0
    %v672 = vld [vmem:[%s5] sm:$0xff]
    %v673 = vld [vmem:[%s5 + $0x8] sm:$0xff]
    %v674 = vld [vmem:[%s5 + $0x10] sm:$0xff]
    %v675 = vld [vmem:[%s5 + $0x18] sm:$0xff]
    %v676 = vld [vmem:[%s5 + $0x20] sm:$0xff]
    %v677 = vld [vmem:[%s5 + $0x28] sm:$0xff]
    %v678 = vld [vmem:[%s5 + $0x30] sm:$0xff]
    %v679 = vld [vmem:[%s5 + $0x38] sm:$0xff]
    %v680 = vld [vmem:[%s5 + $0x40] sm:$0xff]
    %v681 = vld [vmem:[%s5 + $0x48] sm:$0xff]
    %v682 = vld [vmem:[%s5 + $0x50] sm:$0xff]
    %v683 = vld [vmem:[%s5 + $0x58] sm:$0xff]
    %v684 = vld [vmem:[%s5 + $0x60] sm:$0xff]
    %v685 = vld [vmem:[%s5 + $0x68] sm:$0xff]
    %v686 = vld [vmem:[%s5 + $0x70] sm:$0xff]
    %v687 = vld [vmem:[%s5 + $0x78] sm:$0xff]
    %v688 = vlaneseq
    %v689 = vshrl.u32 %v688, 7
    %v690 = vsub.s32 0, %v689
    %v691 = vrot.slane %v32, %v690
    %v692 = vlaneseq
    %v693 = vshrl.u32 %v692, 7
    %v694 = vsub.s32 0, %v693
    %v695 = vrot.slane %v33, %v694
    %v696 = vlaneseq
    %v697 = vshrl.u32 %v696, 7
    %v698 = vsub.s32 0, %v697
    %v699 = vrot.slane %v34, %v698
    %v700 = vlaneseq
    %v701 = vshrl.u32 %v700, 7
    %v702 = vsub.s32 0, %v701
    %v703 = vrot.slane %v35, %v702
    %704 = vmatprep.subr.mxu0 0.0
    %705 = vmatpush1.msra.mxu0 %v672
    %706 = vmatprep.subr.mxu0 0.0
    %707 = vmatpush1.msra.mxu0 %v673
    %708 = vmatprep.subr.mxu0 0.0
    %709 = vmatpush1.msra.mxu0 %v674
    %710 = vmatprep.subr.mxu0 0.0
    %711 = vmatpush1.msra.mxu0 %v675
    %712 = vmatprep.subr.mxu0 0.0
    %713 = vmatpush1.msra.mxu0 %v676
    %714 = vmatprep.subr.mxu0 0.0
    %715 = vmatpush1.msra.mxu0 %v677
    %716 = vmatprep.subr.mxu0 0.0
    %717 = vmatpush1.msra.mxu0 %v678
    %718 = vmatprep.subr.mxu0 0.0
    %719 = vmatpush1.msra.mxu0 %v679
    %720 = vmatprep.subr.mxu0 0.0
    %721 = vmatpush1.msra.mxu0 %v680
    %722 = vmatprep.subr.mxu0 0.0
    %723 = vmatpush1.msra.mxu0 %v681
    %724 = vmatprep.subr.mxu0 0.0
    %725 = vmatpush1.msra.mxu0 %v682
    %726 = vmatprep.subr.mxu0 0.0
    %727 = vmatpush1.msra.mxu0 %v683
    %728 = vmatprep.subr.mxu0 0.0
    %729 = vmatpush1.msra.mxu0 %v684
    %730 = vmatprep.subr.mxu0 0.0
    %731 = vmatpush1.msra.mxu0 %v685
    %732 = vmatprep.subr.mxu0 0.0
    %733 = vmatpush1.msra.mxu0 %v686
    %734 = vmatprep.subr.mxu0 0.0
    %735 = vmatpush1.msra.mxu0 %v687
    %736 = vmatprep.subr.mxu0 0.0
    %737 = vmatpush1.msra.mxu0 0.0
    %738 = vmatprep.subr.mxu0 0.0
    %739 = vmatpush1.msra.mxu0 0.0
    %740 = vmatprep.subr.mxu0 0.0
    %741 = vmatpush1.msra.mxu0 0.0
    %742 = vmatprep.subr.mxu0 0.0
    %743 = vmatpush1.msra.mxu0 0.0
    %744 = vmatprep.subr.mxu0 0.0
    %745 = vmatpush1.msra.mxu0 0.0
    %746 = vmatprep.subr.mxu0 0.0
    %747 = vmatpush1.msra.mxu0 0.0
    %748 = vmatprep.subr.mxu0 0.0
    %749 = vmatpush1.msra.mxu0 0.0
    %750 = vmatprep.subr.mxu0 0.0
    %751 = vmatpush1.msra.mxu0 0.0
    %752 = vmatprep.subr.mxu0 0.0
    %753 = vmatpush1.msra.mxu0 0.0
    %754 = vmatprep.subr.mxu0 0.0
    %755 = vmatpush1.msra.mxu0 0.0
    %756 = vmatprep.subr.mxu0 0.0
    %757 = vmatpush1.msra.mxu0 0.0
    %758 = vmatprep.subr.mxu0 0.0
    %759 = vmatpush1.msra.mxu0 0.0
    %760 = vmatprep.subr.mxu0 0.0
    %761 = vmatpush1.msra.mxu0 0.0
    %762 = vmatprep.subr.mxu0 0.0
    %763 = vmatpush1.msra.mxu0 0.0
    %764 = vmatprep.subr.mxu0 0.0
    %765 = vmatpush1.msra.mxu0 0.0
    %766 = vmatprep.subr.mxu0 0.0
    %767 = vmatpush1.msra.mxu0 0.0
    %768 = vmatprep.mubr.f32.mxu0 0.0
    %769 = vmatmul.mubr.f32.gmra.mrb[0].mxu0 %v664
    %v770 = vpop.f32.mrb[0].mxu0
    %v771 = vadd.f32 %v691, %v770
    %v772 = vpop.f32.mrb[0].mxu0
    %773 = vmatprep.mubr.f32.mxu0 0.0
    %774 = vmatmul.mubr.f32.gmra.mrb[0].mxu0 %v665
    %v775 = vpop.f32.mrb[0].mxu0
    %v776 = vadd.f32 %v691, %v775
    %v777 = vpop.f32.mrb[0].mxu0
    %778 = vmatprep.mubr.f32.mxu0 0.0
    %779 = vmatmul.mubr.f32.gmra.mrb[0].mxu0 %v666
    %v780 = vpop.f32.mrb[0].mxu0
    %v781 = vadd.f32 %v695, %v780
    %v782 = vpop.f32.mrb[0].mxu0
    %783 = vmatprep.mubr.f32.mxu0 0.0
    %784 = vmatmul.mubr.f32.gmra.mrb[0].mxu0 %v667
    %v785 = vpop.f32.mrb[0].mxu0
    %v786 = vadd.f32 %v695, %v785
    %v787 = vpop.f32.mrb[0].mxu0
    %788 = vmatprep.mubr.f32.mxu0 0.0
    %789 = vmatmul.mubr.f32.gmra.mrb[0].mxu0 %v668
    %v790 = vpop.f32.mrb[0].mxu0
    %v791 = vadd.f32 %v699, %v790
    %v792 = vpop.f32.mrb[0].mxu0
    %793 = vmatprep.mubr.f32.mxu0 0.0
    %794 = vmatmul.mubr.f32.gmra.mrb[0].mxu0 %v669
    %v795 = vpop.f32.mrb[0].mxu0
    %v796 = vadd.f32 %v699, %v795
    %v797 = vpop.f32.mrb[0].mxu0
    %798 = vmatprep.mubr.f32.mxu0 0.0
    %799 = vmatmul.mubr.f32.gmra.mrb[0].mxu0 %v670
    %v800 = vpop.f32.mrb[0].mxu0
    %v801 = vadd.f32 %v703, %v800
    %v802 = vpop.f32.mrb[0].mxu0
    %803 = vmatprep.mubr.f32.mxu0 0.0
    %804 = vmatmul.mubr.f32.gmra.mrb[0].mxu0 %v671
    %v805 = vpop.f32.mrb[0].mxu0
    %v806 = vadd.f32 %v703, %v805
    %v807 = vpop.f32.mrb[0].mxu0
    %808 = vdwg.mxu0
    %v809 = vmax.f32 %v771, 0.0
    %v810 = vmax.f32 %v776, 0.0
    %v811 = vmax.f32 %v781, 0.0
    %v812 = vmax.f32 %v786, 0.0
    %v813 = vmax.f32 %v791, 0.0
    %v814 = vmax.f32 %v796, 0.0
    %v815 = vmax.f32 %v801, 0.0
    %v816 = vmax.f32 %v806, 0.0
    %817 = vst [vmem:[#allocation2] sm:$0xff] %v809
    %818 = vst [vmem:[#allocation2 + $0x8] sm:$0xff] %v810
    %819 = vst [vmem:[#allocation2 + $0x10] sm:$0xff] %v811
    %820 = vst [vmem:[#allocation2 + $0x18] sm:$0xff] %v812
    %821 = vst [vmem:[#allocation2 + $0x20] sm:$0xff] %v813
    %822 = vst [vmem:[#allocation2 + $0x28] sm:$0xff] %v814
    %823 = vst [vmem:[#allocation2 + $0x30] sm:$0xff] %v815
    %824 = vst [vmem:[#allocation2 + $0x38] sm:$0xff] %v816
    // Predicated region
    $region26: #{fctree_forward.1} parent=1 // pred_check
      _
    $region27: #{fctree_forward.1} parent=1 // pred_check_branch
      %826 = sbr.rel (0) target = $region29
    $region28: #{fctree_forward.1} parent=1 // pred_region
      %s828 = ssub.s32 1024, 1024
      %829 = vsyncadd [#allocation3], %s828
      %s830 = sshll.u32 [#allocation2], 4
      %s831 = int_to_ptr.vmem [resolvable:$true] %s830
      %836 = dma.vmem_to_hbm [thread:$0]  %s831, 1024, %s6, [#allocation3], 128, 128, 8
    $region29: #{fctree_forward.1} parent=1 // pred_fallthru
      _
    // Predicated region
    $region30: #{fctree_forward.1} parent=1 // pred_check
      _
    $region31: #{fctree_forward.1} parent=1 // pred_check_branch
      %838 = sbr.rel (0) target = $region33
    $region32: #{fctree_forward.1} parent=1 // pred_region
      %839 = dma.done [#allocation3], 1024
    $region33: #{fctree_forward.1} parent=1 // pred_fallthru
      _
    %840 = vsyncpa [#allocation3], 1

</llo_original>
